<compile_context>
chip_gen: v7x
topology: tpu7x:2x2x1
jax: 0.10.0
libtpu: 0.0.40
codegen_flags: <defaults>
</compile_context>

<pallas_src>
import jax
import jax.numpy as jnp
from jax.experimental import pallas as pl
from jax.experimental.pallas import tpu as pltpu

# Below this element count a Pallas launch costs more than it saves.
_PALLAS_MIN_ELEMS = 64 * 1024
_LANE_COLS = 512          # lane-dense columns (multiple of 128)
_MAX_TILE_ROWS = 512      # cap per-block rows -> 1 MiB/buffer at f32


def add9_kernel(x_ref, o_ref):
    # Elementwise hot path: output = input + 9, in the input's native dtype.
    o_ref[...] = x_ref[...] + jnp.asarray(9, dtype=x_ref.dtype)


def _add9_pallas_2d(x2d, tile_r, tile_c):
    rows, cols = x2d.shape
    grid = (rows // tile_r, cols // tile_c)
    return pl.pallas_call(
        add9_kernel,
        out_shape=jax.ShapeDtypeStruct(x2d.shape, x2d.dtype),
        grid=grid,
        in_specs=[pl.BlockSpec((tile_r, tile_c), lambda i, j: (i, j))],
        out_specs=pl.BlockSpec((tile_r, tile_c), lambda i, j: (i, j)),
        compiler_params=pltpu.CompilerParams(
            dimension_semantics=("parallel", "parallel")),
    )(x2d)


def new_nn_forward(x):
    """JAX/Pallas equivalent of New_nn.forward: returns x + 9 (dtype-preserving)."""
    x = jnp.asarray(x)
    n = x.size

    # Fast path: scalar / tiny / empty inputs -> no kernel launch.
    if n < _PALLAS_MIN_ELEMS:
        return x + jnp.asarray(9, dtype=x.dtype)

    orig_shape = x.shape
    flat = x.reshape(-1)

    # Build a lane-dense (rows, 512) view with rows a multiple of 8 (and of
    # the row-tile when the slab is tall enough to need multiple row blocks).
    cols = _LANE_COLS
    rows = -(-n // cols)
    rows8 = -(-rows // 8) * 8
    if rows8 <= _MAX_TILE_ROWS:
        tile_r = rows8
        padded_rows = rows8
    else:
        tile_r = _MAX_TILE_ROWS
        padded_rows = -(-rows8 // _MAX_TILE_ROWS) * _MAX_TILE_ROWS

    pad = padded_rows * cols - n
    flat_padded = jnp.pad(flat, (0, pad)) if pad else flat
    x2d = flat_padded.reshape(padded_rows, cols)

    out2d = _add9_pallas_2d(x2d, tile_r, cols)
    return out2d.reshape(-1)[:n].reshape(orig_shape)


if __name__ == "__main__":
    # 1) The exact reference call pattern: x = torch.tensor(1.0) (0-d scalar).
    #    Takes the fast path (no kernel launch needed for a single add).
    x_scalar = jnp.float32(1.0)
    out_scalar = jax.block_until_ready(new_nn_forward(x_scalar))
    assert out_scalar.shape == (), f"expected scalar output, got {out_scalar.shape}"
    assert out_scalar.dtype == jnp.float32
    assert jnp.allclose(out_scalar, jnp.float32(10.0)), f"got {out_scalar}"

    # 2) A modest tensor that exercises the tiled Pallas path
    #    (256 * 512 = 131072 elements >= threshold).
    key = jax.random.PRNGKey(0)
    x_big = jax.random.normal(key, (256, 512), dtype=jnp.float32)
    out_big = jax.block_until_ready(new_nn_forward(x_big))
    assert out_big.shape == x_big.shape
    assert out_big.dtype == x_big.dtype
    assert jnp.allclose(out_big, x_big + 9.0, atol=1e-6), "pallas path mismatch"

    print("KERNEL_OK")
</pallas_src>

<mosaic_0001>
module attributes {stable_mosaic.version = 11 : i64} {
  func.func @add9_kernel(%arg0: i32, %arg1: i32, %arg2: memref<256x512xf32, #tpu.memory_space<vmem>>, %arg3: memref<256x512xf32, #tpu.memory_space<vmem>>) attributes {dimension_semantics = [#tpu.dimension_semantics<parallel>, #tpu.dimension_semantics<parallel>], iteration_bounds = array<i64: 1, 1>, scalar_prefetch = 0 : i64, scratch_operands = 0 : i64, tpu.core_type = #tpu.core_type<tc>, window_params = [{transform_indices = @transform_0, window_bounds = array<i64: 256, 512>}, {transform_indices = @transform_1, window_bounds = array<i64: 256, 512>}]} {
    %c0 = arith.constant 0 : index
    %c0_0 = arith.constant 0 : index
    %0 = vector.load %arg2[%c0, %c0_0] : memref<256x512xf32, #tpu.memory_space<vmem>>, vector<256x512xf32>
    %cst = arith.constant 9.000000e+00 : f32
    %1 = vector.broadcast %cst : f32 to vector<256x512xf32>
    %2 = arith.addf %0, %1 : vector<256x512xf32>
    %c0_1 = arith.constant 0 : index
    %c0_2 = arith.constant 0 : index
    %3 = vector.load %arg3[%c0_1, %c0_2] : memref<256x512xf32, #tpu.memory_space<vmem>>, vector<256x512xf32>
    tpu.vector_store %arg3[%c0_1, %c0_2], %2 {strides = array<i32>} : memref<256x512xf32, #tpu.memory_space<vmem>>, vector<256x512xf32>,
    return
  }
  func.func @transform_0(%arg0: i32, %arg1: i32) -> (i32, i32) {
    %c0_i32 = arith.constant 0 : i32
    return %arg0, %arg1 : i32, i32
  }
  func.func @transform_1(%arg0: i32, %arg1: i32) -> (i32, i32) {
    %c0_i32 = arith.constant 0 : i32
    return %arg0, %arg1 : i32, i32
  }
}

</mosaic_0001>

<llo_original>
// kernel: tpu_custom_call.1
$region0: #{tpu_custom_call.1}
  #allocation0 [shape = 'u32[]', space=smem, size = 0x4, offset = 0x4, fixed_abs, tag = 'smem constant byte address 0x4 - core index']
  #allocation1 [shape = 'u32[144,128]{1,0:T(1,128)}', space=vmem, size = 0x12000, scoped, tag = 'internal scratch']
  %s0 = inlined_call_operand.hbm [shape: f32[256,512], index: 0, kind: input, shape index: {}]
  %s1 = inlined_call_operand.hbm [shape: f32[256,512], index: 1, kind: output, shape index: {}]
  %s2 = sld [smem:[#allocation0]]
  $region18: #{tpu_custom_call.1} parent=0
    _
  %s4 = ssub.s32 1, %s2
  %s5 = scalar_select 0, %s4, %s2
  $region1: #{tpu_custom_call.1} parent=0
    #allocation2 [shape = 'u8[524288]{0}', space=vmem, size = 0x80000, scoped, tag = 'input window, operand 0, single buffered']
    #allocation3 [shape = 's32[1]{0}', space=sflag, size = 0x4, scoped, tag = 'scoped memory for tpu_custom_call.1']
    #allocation4 [shape = 's32[1]{0}', space=sflag, size = 0x4, scoped, tag = 'scoped memory for tpu_custom_call.1']
    #allocation5 [shape = 'u8[524288]{0}', space=vmem, size = 0x80000, scoped, tag = 'output window, operand 0, single buffered']
    %6 = vsyncpa [#allocation3], 0
    %7 = vsyncpa [#allocation4], 0
    // Predicated region
    $region2: #{tpu_custom_call.1} parent=1 // pred_check
      _
    $region3: #{tpu_custom_call.1} parent=1 // pred_check_branch
      %9 = sbr.rel (0) target = $region5
    $region4: #{tpu_custom_call.1} parent=1 // pred_region
      %s11 = ssub.s32 16384, 16384
      %12 = vsyncadd [#allocation3], %s11
      %s13 = sshll.u32 [#allocation2], 4
      %s14 = int_to_ptr.vmem [resolvable:$true] %s13
      %19 = dma.hbm_to_vmem [thread:$0]  %s0, 16384, %s14, [#allocation3], 512, 512, 32
    $region5: #{tpu_custom_call.1} parent=1 // pred_fallthru
      _
    // Predicated region
    $region6: #{tpu_custom_call.1} parent=1 // pred_check
      _
    $region7: #{tpu_custom_call.1} parent=1 // pred_check_branch
      %21 = sbr.rel (0) target = $region9
    $region8: #{tpu_custom_call.1} parent=1 // pred_region
      %22 = dma.done [#allocation3], 16384
    $region9: #{tpu_custom_call.1} parent=1 // pred_fallthru
      _
    %v23 = vld [vmem:[#allocation2] sm:$0xff]
    %v24 = vld [vmem:[#allocation2 + $0x8] sm:$0xff]
    %v25 = vld [vmem:[#allocation2 + $0x10] sm:$0xff]
    %v26 = vld [vmem:[#allocation2 + $0x18] sm:$0xff]
    %v27 = vld [vmem:[#allocation2 + $0x20] sm:$0xff]
    %v28 = vld [vmem:[#allocation2 + $0x28] sm:$0xff]
    %v29 = vld [vmem:[#allocation2 + $0x30] sm:$0xff]
    %v30 = vld [vmem:[#allocation2 + $0x38] sm:$0xff]
    %v31 = vld [vmem:[#allocation2 + $0x40] sm:$0xff]
    %v32 = vld [vmem:[#allocation2 + $0x48] sm:$0xff]
    %v33 = vld [vmem:[#allocation2 + $0x50] sm:$0xff]
    %v34 = vld [vmem:[#allocation2 + $0x58] sm:$0xff]
    %v35 = vld [vmem:[#allocation2 + $0x60] sm:$0xff]
    %v36 = vld [vmem:[#allocation2 + $0x68] sm:$0xff]
    %v37 = vld [vmem:[#allocation2 + $0x70] sm:$0xff]
    %v38 = vld [vmem:[#allocation2 + $0x78] sm:$0xff]
    %v39 = vld [vmem:[#allocation2 + $0x80] sm:$0xff]
    %v40 = vld [vmem:[#allocation2 + $0x88] sm:$0xff]
    %v41 = vld [vmem:[#allocation2 + $0x90] sm:$0xff]
    %v42 = vld [vmem:[#allocation2 + $0x98] sm:$0xff]
    %v43 = vld [vmem:[#allocation2 + $0xa0] sm:$0xff]
    %v44 = vld [vmem:[#allocation2 + $0xa8] sm:$0xff]
    %v45 = vld [vmem:[#allocation2 + $0xb0] sm:$0xff]
    %v46 = vld [vmem:[#allocation2 + $0xb8] sm:$0xff]
    %v47 = vld [vmem:[#allocation2 + $0xc0] sm:$0xff]
    %v48 = vld [vmem:[#allocation2 + $0xc8] sm:$0xff]
    %v49 = vld [vmem:[#allocation2 + $0xd0] sm:$0xff]
    %v50 = vld [vmem:[#allocation2 + $0xd8] sm:$0xff]
    %v51 = vld [vmem:[#allocation2 + $0xe0] sm:$0xff]
    %v52 = vld [vmem:[#allocation2 + $0xe8] sm:$0xff]
    %v53 = vld [vmem:[#allocation2 + $0xf0] sm:$0xff]
    %v54 = vld [vmem:[#allocation2 + $0xf8] sm:$0xff]
    %v55 = vld [vmem:[#allocation2 + $0x100] sm:$0xff]
    %v56 = vld [vmem:[#allocation2 + $0x108] sm:$0xff]
    %v57 = vld [vmem:[#allocation2 + $0x110] sm:$0xff]
    %v58 = vld [vmem:[#allocation2 + $0x118] sm:$0xff]
    %v59 = vld [vmem:[#allocation2 + $0x120] sm:$0xff]
    %v60 = vld [vmem:[#allocation2 + $0x128] sm:$0xff]
    %v61 = vld [vmem:[#allocation2 + $0x130] sm:$0xff]
    %v62 = vld [vmem:[#allocation2 + $0x138] sm:$0xff]
    %v63 = vld [vmem:[#allocation2 + $0x140] sm:$0xff]
    %v64 = vld [vmem:[#allocation2 + $0x148] sm:$0xff]
    %v65 = vld [vmem:[#allocation2 + $0x150] sm:$0xff]
    %v66 = vld [vmem:[#allocation2 + $0x158] sm:$0xff]
    %v67 = vld [vmem:[#allocation2 + $0x160] sm:$0xff]
    %v68 = vld [vmem:[#allocation2 + $0x168] sm:$0xff]
    %v69 = vld [vmem:[#allocation2 + $0x170] sm:$0xff]
    %v70 = vld [vmem:[#allocation2 + $0x178] sm:$0xff]
    %v71 = vld [vmem:[#allocation2 + $0x180] sm:$0xff]
    %v72 = vld [vmem:[#allocation2 + $0x188] sm:$0xff]
    %v73 = vld [vmem:[#allocation2 + $0x190] sm:$0xff]
    %v74 = vld [vmem:[#allocation2 + $0x198] sm:$0xff]
    %v75 = vld [vmem:[#allocation2 + $0x1a0] sm:$0xff]
    %v76 = vld [vmem:[#allocation2 + $0x1a8] sm:$0xff]
    %v77 = vld [vmem:[#allocation2 + $0x1b0] sm:$0xff]
    %v78 = vld [vmem:[#allocation2 + $0x1b8] sm:$0xff]
    %v79 = vld [vmem:[#allocation2 + $0x1c0] sm:$0xff]
    %v80 = vld [vmem:[#allocation2 + $0x1c8] sm:$0xff]
    %v81 = vld [vmem:[#allocation2 + $0x1d0] sm:$0xff]
    %v82 = vld [vmem:[#allocation2 + $0x1d8] sm:$0xff]
    %v83 = vld [vmem:[#allocation2 + $0x1e0] sm:$0xff]
    %v84 = vld [vmem:[#allocation2 + $0x1e8] sm:$0xff]
    %v85 = vld [vmem:[#allocation2 + $0x1f0] sm:$0xff]
    %v86 = vld [vmem:[#allocation2 + $0x1f8] sm:$0xff]
    %v87 = vld [vmem:[#allocation2 + $0x200] sm:$0xff]
    %v88 = vld [vmem:[#allocation2 + $0x208] sm:$0xff]
    %v89 = vld [vmem:[#allocation2 + $0x210] sm:$0xff]
    %v90 = vld [vmem:[#allocation2 + $0x218] sm:$0xff]
    %v91 = vld [vmem:[#allocation2 + $0x220] sm:$0xff]
    %v92 = vld [vmem:[#allocation2 + $0x228] sm:$0xff]
    %v93 = vld [vmem:[#allocation2 + $0x230] sm:$0xff]
    %v94 = vld [vmem:[#allocation2 + $0x238] sm:$0xff]
    %v95 = vld [vmem:[#allocation2 + $0x240] sm:$0xff]
    %v96 = vld [vmem:[#allocation2 + $0x248] sm:$0xff]
    %v97 = vld [vmem:[#allocation2 + $0x250] sm:$0xff]
    %v98 = vld [vmem:[#allocation2 + $0x258] sm:$0xff]
    %v99 = vld [vmem:[#allocation2 + $0x260] sm:$0xff]
    %v100 = vld [vmem:[#allocation2 + $0x268] sm:$0xff]
    %v101 = vld [vmem:[#allocation2 + $0x270] sm:$0xff]
    %v102 = vld [vmem:[#allocation2 + $0x278] sm:$0xff]
    %v103 = vld [vmem:[#allocation2 + $0x280] sm:$0xff]
    %v104 = vld [vmem:[#allocation2 + $0x288] sm:$0xff]
    %v105 = vld [vmem:[#allocation2 + $0x290] sm:$0xff]
    %v106 = vld [vmem:[#allocation2 + $0x298] sm:$0xff]
    %v107 = vld [vmem:[#allocation2 + $0x2a0] sm:$0xff]
    %v108 = vld [vmem:[#allocation2 + $0x2a8] sm:$0xff]
    %v109 = vld [vmem:[#allocation2 + $0x2b0] sm:$0xff]
    %v110 = vld [vmem:[#allocation2 + $0x2b8] sm:$0xff]
    %v111 = vld [vmem:[#allocation2 + $0x2c0] sm:$0xff]
    %v112 = vld [vmem:[#allocation2 + $0x2c8] sm:$0xff]
    %v113 = vld [vmem:[#allocation2 + $0x2d0] sm:$0xff]
    %v114 = vld [vmem:[#allocation2 + $0x2d8] sm:$0xff]
    %v115 = vld [vmem:[#allocation2 + $0x2e0] sm:$0xff]
    %v116 = vld [vmem:[#allocation2 + $0x2e8] sm:$0xff]
    %v117 = vld [vmem:[#allocation2 + $0x2f0] sm:$0xff]
    %v118 = vld [vmem:[#allocation2 + $0x2f8] sm:$0xff]
    %v119 = vld [vmem:[#allocation2 + $0x300] sm:$0xff]
    %v120 = vld [vmem:[#allocation2 + $0x308] sm:$0xff]
    %v121 = vld [vmem:[#allocation2 + $0x310] sm:$0xff]
    %v122 = vld [vmem:[#allocation2 + $0x318] sm:$0xff]
    %v123 = vld [vmem:[#allocation2 + $0x320] sm:$0xff]
    %v124 = vld [vmem:[#allocation2 + $0x328] sm:$0xff]
    %v125 = vld [vmem:[#allocation2 + $0x330] sm:$0xff]
    %v126 = vld [vmem:[#allocation2 + $0x338] sm:$0xff]
    %v127 = vld [vmem:[#allocation2 + $0x340] sm:$0xff]
    %v128 = vld [vmem:[#allocation2 + $0x348] sm:$0xff]
    %v129 = vld [vmem:[#allocation2 + $0x350] sm:$0xff]
    %v130 = vld [vmem:[#allocation2 + $0x358] sm:$0xff]
    %v131 = vld [vmem:[#allocation2 + $0x360] sm:$0xff]
    %v132 = vld [vmem:[#allocation2 + $0x368] sm:$0xff]
    %v133 = vld [vmem:[#allocation2 + $0x370] sm:$0xff]
    %v134 = vld [vmem:[#allocation2 + $0x378] sm:$0xff]
    %v135 = vld [vmem:[#allocation2 + $0x380] sm:$0xff]
    %v136 = vld [vmem:[#allocation2 + $0x388] sm:$0xff]
    %v137 = vld [vmem:[#allocation2 + $0x390] sm:$0xff]
    %v138 = vld [vmem:[#allocation2 + $0x398] sm:$0xff]
    %v139 = vld [vmem:[#allocation2 + $0x3a0] sm:$0xff]
    %v140 = vld [vmem:[#allocation2 + $0x3a8] sm:$0xff]
    %v141 = vld [vmem:[#allocation2 + $0x3b0] sm:$0xff]
    %v142 = vld [vmem:[#allocation2 + $0x3b8] sm:$0xff]
    %v143 = vld [vmem:[#allocation2 + $0x3c0] sm:$0xff]
    %v144 = vld [vmem:[#allocation2 + $0x3c8] sm:$0xff]
    %v145 = vld [vmem:[#allocation2 + $0x3d0] sm:$0xff]
    %v146 = vld [vmem:[#allocation2 + $0x3d8] sm:$0xff]
    %v147 = vld [vmem:[#allocation2 + $0x3e0] sm:$0xff]
    %v148 = vld [vmem:[#allocation2 + $0x3e8] sm:$0xff]
    %v149 = vld [vmem:[#allocation2 + $0x3f0] sm:$0xff]
    %v150 = vld [vmem:[#allocation2 + $0x3f8] sm:$0xff]
    %v151 = vadd.f32 %v23, 9.0
    %v152 = vadd.f32 %v24, 9.0
    %v153 = vadd.f32 %v25, 9.0
    %v154 = vadd.f32 %v26, 9.0
    %v155 = vadd.f32 %v27, 9.0
    %v156 = vadd.f32 %v28, 9.0
    %v157 = vadd.f32 %v29, 9.0
    %v158 = vadd.f32 %v30, 9.0
    %v159 = vadd.f32 %v31, 9.0
    %v160 = vadd.f32 %v32, 9.0
    %v161 = vadd.f32 %v33, 9.0
    %v162 = vadd.f32 %v34, 9.0
    %v163 = vadd.f32 %v35, 9.0
    %v164 = vadd.f32 %v36, 9.0
    %v165 = vadd.f32 %v37, 9.0
    %v166 = vadd.f32 %v38, 9.0
    %v167 = vadd.f32 %v39, 9.0
    %v168 = vadd.f32 %v40, 9.0
    %v169 = vadd.f32 %v41, 9.0
    %v170 = vadd.f32 %v42, 9.0
    %v171 = vadd.f32 %v43, 9.0
    %v172 = vadd.f32 %v44, 9.0
    %v173 = vadd.f32 %v45, 9.0
    %v174 = vadd.f32 %v46, 9.0
    %v175 = vadd.f32 %v47, 9.0
    %v176 = vadd.f32 %v48, 9.0
    %v177 = vadd.f32 %v49, 9.0
    %v178 = vadd.f32 %v50, 9.0
    %v179 = vadd.f32 %v51, 9.0
    %v180 = vadd.f32 %v52, 9.0
    %v181 = vadd.f32 %v53, 9.0
    %v182 = vadd.f32 %v54, 9.0
    %v183 = vadd.f32 %v55, 9.0
    %v184 = vadd.f32 %v56, 9.0
    %v185 = vadd.f32 %v57, 9.0
    %v186 = vadd.f32 %v58, 9.0
    %v187 = vadd.f32 %v59, 9.0
    %v188 = vadd.f32 %v60, 9.0
    %v189 = vadd.f32 %v61, 9.0
    %v190 = vadd.f32 %v62, 9.0
    %v191 = vadd.f32 %v63, 9.0
    %v192 = vadd.f32 %v64, 9.0
    %v193 = vadd.f32 %v65, 9.0
    %v194 = vadd.f32 %v66, 9.0
    %v195 = vadd.f32 %v67, 9.0
    %v196 = vadd.f32 %v68, 9.0
    %v197 = vadd.f32 %v69, 9.0
    %v198 = vadd.f32 %v70, 9.0
    %v199 = vadd.f32 %v71, 9.0
    %v200 = vadd.f32 %v72, 9.0
    %v201 = vadd.f32 %v73, 9.0
    %v202 = vadd.f32 %v74, 9.0
    %v203 = vadd.f32 %v75, 9.0
    %v204 = vadd.f32 %v76, 9.0
    %v205 = vadd.f32 %v77, 9.0
    %v206 = vadd.f32 %v78, 9.0
    %v207 = vadd.f32 %v79, 9.0
    %v208 = vadd.f32 %v80, 9.0
    %v209 = vadd.f32 %v81, 9.0
    %v210 = vadd.f32 %v82, 9.0
    %v211 = vadd.f32 %v83, 9.0
    %v212 = vadd.f32 %v84, 9.0
    %v213 = vadd.f32 %v85, 9.0
    %v214 = vadd.f32 %v86, 9.0
    %v215 = vadd.f32 %v87, 9.0
    %v216 = vadd.f32 %v88, 9.0
    %v217 = vadd.f32 %v89, 9.0
    %v218 = vadd.f32 %v90, 9.0
    %v219 = vadd.f32 %v91, 9.0
    %v220 = vadd.f32 %v92, 9.0
    %v221 = vadd.f32 %v93, 9.0
    %v222 = vadd.f32 %v94, 9.0
    %v223 = vadd.f32 %v95, 9.0
    %v224 = vadd.f32 %v96, 9.0
    %v225 = vadd.f32 %v97, 9.0
    %v226 = vadd.f32 %v98, 9.0
    %v227 = vadd.f32 %v99, 9.0
    %v228 = vadd.f32 %v100, 9.0
    %v229 = vadd.f32 %v101, 9.0
    %v230 = vadd.f32 %v102, 9.0
    %v231 = vadd.f32 %v103, 9.0
    %v232 = vadd.f32 %v104, 9.0
    %v233 = vadd.f32 %v105, 9.0
    %v234 = vadd.f32 %v106, 9.0
    %v235 = vadd.f32 %v107, 9.0
    %v236 = vadd.f32 %v108, 9.0
    %v237 = vadd.f32 %v109, 9.0
    %v238 = vadd.f32 %v110, 9.0
    %v239 = vadd.f32 %v111, 9.0
    %v240 = vadd.f32 %v112, 9.0
    %v241 = vadd.f32 %v113, 9.0
    %v242 = vadd.f32 %v114, 9.0
    %v243 = vadd.f32 %v115, 9.0
    %v244 = vadd.f32 %v116, 9.0
    %v245 = vadd.f32 %v117, 9.0
    %v246 = vadd.f32 %v118, 9.0
    %v247 = vadd.f32 %v119, 9.0
    %v248 = vadd.f32 %v120, 9.0
    %v249 = vadd.f32 %v121, 9.0
    %v250 = vadd.f32 %v122, 9.0
    %v251 = vadd.f32 %v123, 9.0
    %v252 = vadd.f32 %v124, 9.0
    %v253 = vadd.f32 %v125, 9.0
    %v254 = vadd.f32 %v126, 9.0
    %v255 = vadd.f32 %v127, 9.0
    %v256 = vadd.f32 %v128, 9.0
    %v257 = vadd.f32 %v129, 9.0
    %v258 = vadd.f32 %v130, 9.0
    %v259 = vadd.f32 %v131, 9.0
    %v260 = vadd.f32 %v132, 9.0
    %v261 = vadd.f32 %v133, 9.0
    %v262 = vadd.f32 %v134, 9.0
    %v263 = vadd.f32 %v135, 9.0
    %v264 = vadd.f32 %v136, 9.0
    %v265 = vadd.f32 %v137, 9.0
    %v266 = vadd.f32 %v138, 9.0
    %v267 = vadd.f32 %v139, 9.0
    %v268 = vadd.f32 %v140, 9.0
    %v269 = vadd.f32 %v141, 9.0
    %v270 = vadd.f32 %v142, 9.0
    %v271 = vadd.f32 %v143, 9.0
    %v272 = vadd.f32 %v144, 9.0
    %v273 = vadd.f32 %v145, 9.0
    %v274 = vadd.f32 %v146, 9.0
    %v275 = vadd.f32 %v147, 9.0
    %v276 = vadd.f32 %v148, 9.0
    %v277 = vadd.f32 %v149, 9.0
    %v278 = vadd.f32 %v150, 9.0
    %279 = vst [vmem:[#allocation5] sm:$0xff] %v151
    %280 = vst [vmem:[#allocation5 + $0x8] sm:$0xff] %v152
    %281 = vst [vmem:[#allocation5 + $0x10] sm:$0xff] %v153
    %282 = vst [vmem:[#allocation5 + $0x18] sm:$0xff] %v154
    %283 = vst [vmem:[#allocation5 + $0x20] sm:$0xff] %v155
    %284 = vst [vmem:[#allocation5 + $0x28] sm:$0xff] %v156
    %285 = vst [vmem:[#allocation5 + $0x30] sm:$0xff] %v157
    %286 = vst [vmem:[#allocation5 + $0x38] sm:$0xff] %v158
    %287 = vst [vmem:[#allocation5 + $0x40] sm:$0xff] %v159
    %288 = vst [vmem:[#allocation5 + $0x48] sm:$0xff] %v160
    %289 = vst [vmem:[#allocation5 + $0x50] sm:$0xff] %v161
    %290 = vst [vmem:[#allocation5 + $0x58] sm:$0xff] %v162
    %291 = vst [vmem:[#allocation5 + $0x60] sm:$0xff] %v163
    %292 = vst [vmem:[#allocation5 + $0x68] sm:$0xff] %v164
    %293 = vst [vmem:[#allocation5 + $0x70] sm:$0xff] %v165
    %294 = vst [vmem:[#allocation5 + $0x78] sm:$0xff] %v166
    %295 = vst [vmem:[#allocation5 + $0x80] sm:$0xff] %v167
    %296 = vst [vmem:[#allocation5 + $0x88] sm:$0xff] %v168
    %297 = vst [vmem:[#allocation5 + $0x90] sm:$0xff] %v169
    %298 = vst [vmem:[#allocation5 + $0x98] sm:$0xff] %v170
    %299 = vst [vmem:[#allocation5 + $0xa0] sm:$0xff] %v171
    %300 = vst [vmem:[#allocation5 + $0xa8] sm:$0xff] %v172
    %301 = vst [vmem:[#allocation5 + $0xb0] sm:$0xff] %v173
    %302 = vst [vmem:[#allocation5 + $0xb8] sm:$0xff] %v174
    %303 = vst [vmem:[#allocation5 + $0xc0] sm:$0xff] %v175
    %304 = vst [vmem:[#allocation5 + $0xc8] sm:$0xff] %v176
    %305 = vst [vmem:[#allocation5 + $0xd0] sm:$0xff] %v177
    %306 = vst [vmem:[#allocation5 + $0xd8] sm:$0xff] %v178
    %307 = vst [vmem:[#allocation5 + $0xe0] sm:$0xff] %v179
    %308 = vst [vmem:[#allocation5 + $0xe8] sm:$0xff] %v180
    %309 = vst [vmem:[#allocation5 + $0xf0] sm:$0xff] %v181
    %310 = vst [vmem:[#allocation5 + $0xf8] sm:$0xff] %v182
    %311 = vst [vmem:[#allocation5 + $0x100] sm:$0xff] %v183
    %312 = vst [vmem:[#allocation5 + $0x108] sm:$0xff] %v184
    %313 = vst [vmem:[#allocation5 + $0x110] sm:$0xff] %v185
    %314 = vst [vmem:[#allocation5 + $0x118] sm:$0xff] %v186
    %315 = vst [vmem:[#allocation5 + $0x120] sm:$0xff] %v187
    %316 = vst [vmem:[#allocation5 + $0x128] sm:$0xff] %v188
    %317 = vst [vmem:[#allocation5 + $0x130] sm:$0xff] %v189
    %318 = vst [vmem:[#allocation5 + $0x138] sm:$0xff] %v190
    %319 = vst [vmem:[#allocation5 + $0x140] sm:$0xff] %v191
    %320 = vst [vmem:[#allocation5 + $0x148] sm:$0xff] %v192
    %321 = vst [vmem:[#allocation5 + $0x150] sm:$0xff] %v193
    %322 = vst [vmem:[#allocation5 + $0x158] sm:$0xff] %v194
    %323 = vst [vmem:[#allocation5 + $0x160] sm:$0xff] %v195
    %324 = vst [vmem:[#allocation5 + $0x168] sm:$0xff] %v196
    %325 = vst [vmem:[#allocation5 + $0x170] sm:$0xff] %v197
    %326 = vst [vmem:[#allocation5 + $0x178] sm:$0xff] %v198
    %327 = vst [vmem:[#allocation5 + $0x180] sm:$0xff] %v199
    %328 = vst [vmem:[#allocation5 + $0x188] sm:$0xff] %v200
    %329 = vst [vmem:[#allocation5 + $0x190] sm:$0xff] %v201
    %330 = vst [vmem:[#allocation5 + $0x198] sm:$0xff] %v202
    %331 = vst [vmem:[#allocation5 + $0x1a0] sm:$0xff] %v203
    %332 = vst [vmem:[#allocation5 + $0x1a8] sm:$0xff] %v204
    %333 = vst [vmem:[#allocation5 + $0x1b0] sm:$0xff] %v205
    %334 = vst [vmem:[#allocation5 + $0x1b8] sm:$0xff] %v206
    %335 = vst [vmem:[#allocation5 + $0x1c0] sm:$0xff] %v207
    %336 = vst [vmem:[#allocation5 + $0x1c8] sm:$0xff] %v208
    %337 = vst [vmem:[#allocation5 + $0x1d0] sm:$0xff] %v209
    %338 = vst [vmem:[#allocation5 + $0x1d8] sm:$0xff] %v210
    %339 = vst [vmem:[#allocation5 + $0x1e0] sm:$0xff] %v211
    %340 = vst [vmem:[#allocation5 + $0x1e8] sm:$0xff] %v212
    %341 = vst [vmem:[#allocation5 + $0x1f0] sm:$0xff] %v213
    %342 = vst [vmem:[#allocation5 + $0x1f8] sm:$0xff] %v214
    %343 = vst [vmem:[#allocation5 + $0x200] sm:$0xff] %v215
    %344 = vst [vmem:[#allocation5 + $0x208] sm:$0xff] %v216
    %345 = vst [vmem:[#allocation5 + $0x210] sm:$0xff] %v217
    %346 = vst [vmem:[#allocation5 + $0x218] sm:$0xff] %v218
    %347 = vst [vmem:[#allocation5 + $0x220] sm:$0xff] %v219
    %348 = vst [vmem:[#allocation5 + $0x228] sm:$0xff] %v220
    %349 = vst [vmem:[#allocation5 + $0x230] sm:$0xff] %v221
    %350 = vst [vmem:[#allocation5 + $0x238] sm:$0xff] %v222
    %351 = vst [vmem:[#allocation5 + $0x240] sm:$0xff] %v223
    %352 = vst [vmem:[#allocation5 + $0x248] sm:$0xff] %v224
    %353 = vst [vmem:[#allocation5 + $0x250] sm:$0xff] %v225
    %354 = vst [vmem:[#allocation5 + $0x258] sm:$0xff] %v226
    %355 = vst [vmem:[#allocation5 + $0x260] sm:$0xff] %v227
    %356 = vst [vmem:[#allocation5 + $0x268] sm:$0xff] %v228
    %357 = vst [vmem:[#allocation5 + $0x270] sm:$0xff] %v229
    %358 = vst [vmem:[#allocation5 + $0x278] sm:$0xff] %v230
    %359 = vst [vmem:[#allocation5 + $0x280] sm:$0xff] %v231
    %360 = vst [vmem:[#allocation5 + $0x288] sm:$0xff] %v232
    %361 = vst [vmem:[#allocation5 + $0x290] sm:$0xff] %v233
    %362 = vst [vmem:[#allocation5 + $0x298] sm:$0xff] %v234
    %363 = vst [vmem:[#allocation5 + $0x2a0] sm:$0xff] %v235
    %364 = vst [vmem:[#allocation5 + $0x2a8] sm:$0xff] %v236
    %365 = vst [vmem:[#allocation5 + $0x2b0] sm:$0xff] %v237
    %366 = vst [vmem:[#allocation5 + $0x2b8] sm:$0xff] %v238
    %367 = vst [vmem:[#allocation5 + $0x2c0] sm:$0xff] %v239
    %368 = vst [vmem:[#allocation5 + $0x2c8] sm:$0xff] %v240
    %369 = vst [vmem:[#allocation5 + $0x2d0] sm:$0xff] %v241
    %370 = vst [vmem:[#allocation5 + $0x2d8] sm:$0xff] %v242
    %371 = vst [vmem:[#allocation5 + $0x2e0] sm:$0xff] %v243
    %372 = vst [vmem:[#allocation5 + $0x2e8] sm:$0xff] %v244
    %373 = vst [vmem:[#allocation5 + $0x2f0] sm:$0xff] %v245
    %374 = vst [vmem:[#allocation5 + $0x2f8] sm:$0xff] %v246
    %375 = vst [vmem:[#allocation5 + $0x300] sm:$0xff] %v247
    %376 = vst [vmem:[#allocation5 + $0x308] sm:$0xff] %v248
    %377 = vst [vmem:[#allocation5 + $0x310] sm:$0xff] %v249
    %378 = vst [vmem:[#allocation5 + $0x318] sm:$0xff] %v250
    %379 = vst [vmem:[#allocation5 + $0x320] sm:$0xff] %v251
    %380 = vst [vmem:[#allocation5 + $0x328] sm:$0xff] %v252
    %381 = vst [vmem:[#allocation5 + $0x330] sm:$0xff] %v253
    %382 = vst [vmem:[#allocation5 + $0x338] sm:$0xff] %v254
    %383 = vst [vmem:[#allocation5 + $0x340] sm:$0xff] %v255
    %384 = vst [vmem:[#allocation5 + $0x348] sm:$0xff] %v256
    %385 = vst [vmem:[#allocation5 + $0x350] sm:$0xff] %v257
    %386 = vst [vmem:[#allocation5 + $0x358] sm:$0xff] %v258
    %387 = vst [vmem:[#allocation5 + $0x360] sm:$0xff] %v259
    %388 = vst [vmem:[#allocation5 + $0x368] sm:$0xff] %v260
    %389 = vst [vmem:[#allocation5 + $0x370] sm:$0xff] %v261
    %390 = vst [vmem:[#allocation5 + $0x378] sm:$0xff] %v262
    %391 = vst [vmem:[#allocation5 + $0x380] sm:$0xff] %v263
    %392 = vst [vmem:[#allocation5 + $0x388] sm:$0xff] %v264
    %393 = vst [vmem:[#allocation5 + $0x390] sm:$0xff] %v265
    %394 = vst [vmem:[#allocation5 + $0x398] sm:$0xff] %v266
    %395 = vst [vmem:[#allocation5 + $0x3a0] sm:$0xff] %v267
    %396 = vst [vmem:[#allocation5 + $0x3a8] sm:$0xff] %v268
    %397 = vst [vmem:[#allocation5 + $0x3b0] sm:$0xff] %v269
    %398 = vst [vmem:[#allocation5 + $0x3b8] sm:$0xff] %v270
    %399 = vst [vmem:[#allocation5 + $0x3c0] sm:$0xff] %v271
    %400 = vst [vmem:[#allocation5 + $0x3c8] sm:$0xff] %v272
    %401 = vst [vmem:[#allocation5 + $0x3d0] sm:$0xff] %v273
    %402 = vst [vmem:[#allocation5 + $0x3d8] sm:$0xff] %v274
    %403 = vst [vmem:[#allocation5 + $0x3e0] sm:$0xff] %v275
    %404 = vst [vmem:[#allocation5 + $0x3e8] sm:$0xff] %v276
    %405 = vst [vmem:[#allocation5 + $0x3f0] sm:$0xff] %v277
    %406 = vst [vmem:[#allocation5 + $0x3f8] sm:$0xff] %v278
    // Predicated region
    $region10: #{tpu_custom_call.1} parent=1 // pred_check
      _
    $region11: #{tpu_custom_call.1} parent=1 // pred_check_branch
      %408 = sbr.rel (0) target = $region13
    $region12: #{tpu_custom_call.1} parent=1 // pred_region
      %s410 = ssub.s32 16384, 16384
      %411 = vsyncadd [#allocation4], %s410
      %s412 = sshll.u32 [#allocation5], 4
      %s413 = int_to_ptr.vmem [resolvable:$true] %s412
      %418 = dma.vmem_to_hbm [thread:$0]  %s413, 16384, %s1, [#allocation4], 512, 512, 32
    $region13: #{tpu_custom_call.1} parent=1 // pred_fallthru
      _
    // Predicated region
    $region14: #{tpu_custom_call.1} parent=1 // pred_check
      _
    $region15: #{tpu_custom_call.1} parent=1 // pred_check_branch
      %420 = sbr.rel (0) target = $region17
    $region16: #{tpu_custom_call.1} parent=1 // pred_region
      %421 = dma.done [#allocation4], 16384
    $region17: #{tpu_custom_call.1} parent=1 // pred_fallthru
      _
    %422 = vsyncpa [#allocation3], 1
    %423 = vsyncpa [#allocation4], 1

</llo_original>
